<compile_context>
chip_gen: v5e
topology: v5e:2x2
jax: 0.10.0
libtpu: 0.0.40
codegen_flags: <defaults>
</compile_context>

<pallas_src>
import functools

import jax
import jax.numpy as jnp
from jax.experimental import pallas as pl
from jax.experimental.pallas import tpu as pltpu


def _round_up(a: int, b: int) -> int:
    return ((a + b - 1) // b) * b


def _vmem_capacity_bytes() -> int:
    """Physical per-core VMEM; conservative fallback if the query is unavailable."""
    try:
        return int(pltpu.get_tpu_info().vmem_capacity_bytes)
    except Exception:
        return 64 << 20          # v7x per-TC capacity: safe lower bound everywhere


def _num_tensorcores() -> int:
    """Best-effort TensorCores-per-chip (2 only on v7x-class parts)."""
    try:
        d = jax.devices()[0]
        kind = str(getattr(d, "device_kind", "")).lower()
        if "v7" in kind or "7x" in kind:
            return 2
        for attr in ("num_cores", "core_count"):
            v = getattr(d, attr, None)
            if isinstance(v, int) and v > 0:
                return int(v)
    except Exception:
        pass
    return 1


def _choose_block_n(n: int, avail_bytes: int, per_row_bytes: int,
                    n_cores: int, max_block: int = 512) -> int:
    bn = min(max(avail_bytes // per_row_bytes, 8), max_block, n)
    # Only split the batch when the chip has 2 TensorCores (v7x) AND each shard
    # keeps a healthy MXU M dimension; single-TC chips (v5e/v6e) take the largest
    # tile that fits — there the grid is a serial loop and splitting only adds
    # per-step overhead and shrinks the MXU M tile.
    if n_cores >= 2:
        shard = -(-n // n_cores)
        if shard >= 256 and bn > shard:
            bn = shard
    return max(8, (int(bn) // 8) * 8)


def _codebook_mapper_kernel(x_ref, cb_ref, o_ref, *, inv_tau: float,
                            k_valid: int, k_pad: int, compute_dtype,
                            use_static_max: bool, scale_after: bool):
    x = x_ref[...]                                   # (TN, Dp), caller dtype
    cb = cb_ref[...]                                 # (Kp, Dp), compute dtype

    # F.normalize(x, dim=1): x / max(||x||, 1e-12).  1/tau folded into the scale.
    x_f32 = x.astype(jnp.float32)
    sum_sq = jnp.sum(x_f32 * x_f32, axis=-1, keepdims=True)
    scale = jax.lax.rsqrt(jnp.maximum(sum_sq, 1e-24)) * inv_tau      # (TN, 1) f32

    if scale_after:
        # Scale the (TN, Kp) similarity tile after the matmul: keeps the scale in
        # f32 (more accurate with bf16 MXU inputs) and skips a (TN, Dp) multiply.
        x_cmp = x.astype(compute_dtype)
    else:
        x_cmp = (x_f32 * scale).astype(compute_dtype)

    # sim = (x_n @ cb.T) / tau  -- trans-B contraction, codebook stays [K, D].
    sim = jax.lax.dot_general(
        x_cmp, cb,
        dimension_numbers=(((1,), (1,)), ((), ())),
        preferred_element_type=jnp.float32)                          # (TN, Kp)
    if scale_after:
        sim = sim * scale

    # Mask lane-padding columns out of the softmax.
    if k_valid < k_pad:
        col = jax.lax.broadcasted_iota(jnp.int32, sim.shape, 1)
        sim = jnp.where(col < k_valid, sim, -1e30)

    # Softmax over the codebook dimension.  With unit-norm codebook rows and the
    # in-kernel L2 normalization, sim <= 1/tau, so the static bound replaces the
    # per-row cross-lane max reduce (frees the vector-extended slot shared with
    # the MXU pushes).  Fallback path keeps the exact max.
    if use_static_max:
        e = jnp.exp(sim - inv_tau)
    else:
        e = jnp.exp(sim - jnp.max(sim, axis=-1, keepdims=True))
    denom = jnp.sum(e, axis=-1, keepdims=True)
    soft = e * pl.reciprocal(denom)                  # exact: only (TN, 1) values

    # quantized = soft @ codebook (padded codebook rows are zero / masked out).
    q = jnp.dot(soft.astype(compute_dtype), cb, preferred_element_type=jnp.float32)
    o_ref[...] = q.astype(o_ref.dtype)


def codebook_mapper_forward(x: jax.Array, codebook: jax.Array, tau: float = 0.07,
                            *, block_n: int | None = None, compute_dtype=None,
                            codebook_unit_norm: bool = True) -> jax.Array:
    """x: (N, D) features; codebook: (K, D), rows unit-norm per module __init__."""
    N, D = x.shape
    K, Dc = codebook.shape
    assert D == Dc, "x feature dim must match codebook feature dim"

    # MXU-native compute dtype: bf16 when callers pass f32 (much faster matmuls,
    # half the codebook VMEM residency); accumulate in f32 regardless.
    if compute_dtype is None:
        compute_dtype = jnp.bfloat16 if codebook.dtype == jnp.float32 else codebook.dtype
    comp_itemsize = jnp.dtype(compute_dtype).itemsize
    x_itemsize = jnp.dtype(x.dtype).itemsize

    # Lane-pad codebook rows (K) and the feature dim (D) to multiples of 128 so
    # the sim tile and the (block_n, D) output block are lane-dense.
    k_pad = _round_up(K, 128)
    d_pad = _round_up(D, 128)
    cb = codebook.astype(compute_dtype)
    if k_pad != K or d_pad != D:
        cb = jnp.pad(cb, ((0, k_pad - K), (0, d_pad - D)))
    x_in = jnp.pad(x, ((0, 0), (0, d_pad - D))) if d_pad != D else x

    # Generation-aware VMEM budget: ~2/3 of physical capacity as the scoped limit
    # (~85 MiB on v5e/v6e's 128 MiB, ~42 MiB on v7x's 64 MiB).
    capacity = _vmem_capacity_bytes()
    vmem_limit = min((capacity * 2) // 3, 96 << 20)
    headroom = 6 << 20                               # compiler scratch, sems, etc.

    cb_bytes = k_pad * d_pad * comp_itemsize         # single resident copy
    per_row = (2 * d_pad * x_itemsize                # x tile (2 pipeline buffers)
               + 2 * d_pad * x_itemsize              # out tile (2 pipeline buffers)
               + d_pad * (4 + comp_itemsize + 4)     # x_f32, x_cmp, f32 q acc
               + k_pad * (4 + 4 + comp_itemsize))    # sim, exp, soft
    min_need = cb_bytes + 8 * per_row + headroom
    if min_need > vmem_limit:
        # Grow the limit toward physical capacity before giving up.
        vmem_limit = min(min_need + (8 << 20), capacity - (4 << 20))
        if min_need > vmem_limit:
            # TODO(synk): K-tiled online-softmax (flash-style) variant for codebooks
            # too large to keep VMEM-resident (first breaks on v7x's 64 MiB).
            raise ValueError(
                f"codebook ({cb_bytes / 2**20:.1f} MiB resident) does not fit the "
                f"{capacity / 2**20:.0f} MiB VMEM of this chip; K-tiled variant needed")
    budget = vmem_limit - headroom

    if block_n is None:
        block_n = _choose_block_n(N, budget - cb_bytes, per_row, _num_tensorcores())
    block_n = max(8, (min(int(block_n), 512) // 8) * 8)

    n_pad = _round_up(N, block_n)
    if n_pad != N:
        # Padded rows are all-zero: sim stays 0 -> finite softmax; sliced off below.
        x_in = jnp.pad(x_in, ((0, n_pad - N), (0, 0)))

    inv_tau = 1.0 / float(tau)
    kernel = functools.partial(
        _codebook_mapper_kernel,
        inv_tau=inv_tau, k_valid=K, k_pad=k_pad, compute_dtype=compute_dtype,
        use_static_max=bool(codebook_unit_norm) and inv_tau <= 80.0,
        scale_after=k_pad <= d_pad)

    cost = pl.CostEstimate(
        flops=int(4 * n_pad * k_pad * d_pad),
        transcendentals=int(n_pad * (k_pad + 2)),
        bytes_accessed=int(n_pad * d_pad * x_itemsize        # x read
                           + k_pad * d_pad * comp_itemsize   # codebook read
                           + n_pad * d_pad * x_itemsize))    # output write

    def _build(single_buffer_codebook: bool):
        cb_kwargs = {"pipeline_mode": pl.Buffered(1)} if single_buffer_codebook else {}
        return pl.pallas_call(
            kernel,
            out_shape=jax.ShapeDtypeStruct((n_pad, d_pad), x.dtype),
            grid_spec=pltpu.PrefetchScalarGridSpec(
                num_scalar_prefetch=0,
                grid=(n_pad // block_n,),
                in_specs=[
                    pl.BlockSpec((block_n, d_pad), lambda i: (i, 0)),      # x tile
                    pl.BlockSpec((k_pad, d_pad), lambda i: (0, 0),         # codebook
                                 **cb_kwargs),
                ],
                out_specs=pl.BlockSpec((block_n, d_pad), lambda i: (i, 0)),
            ),
            compiler_params=pltpu.CompilerParams(
                dimension_semantics=("parallel",),
                vmem_limit_bytes=int(vmem_limit),
            ),
            cost_estimate=cost,
        )

    try:
        out = _build(True)(x_in, cb)
    except Exception:
        # pipeline_mode=pl.Buffered(1) unsupported on this jax/Mosaic build: fall
        # back to the default (double-buffered, but DMA'd-once) resident codebook.
        out = _build(False)(x_in, cb)

    if n_pad != N or d_pad != D:
        out = out[:N, :D]
    return out


def _reference(x, codebook, tau):
    xn = x / jnp.maximum(jnp.linalg.norm(x, axis=1, keepdims=True), 1e-12)
    sim = xn @ codebook.T / tau
    soft = jax.nn.softmax(sim, axis=1)
    return soft @ codebook


# TODO(synk): training-time straight-through estimator and the EMA `update()` of the
# codebook are training-only (no effect on the inference forward) and are not ported.

if __name__ == "__main__":
    codebook_size = 32
    feature_dim = 128
    batch = 16
    tau = 0.07

    key = jax.random.PRNGKey(0)
    k_cb, k_x = jax.random.split(key)

    # Deterministic codebook init mirroring the module's __init__:
    # uniform in [-1/K, 1/K], then L2-normalize rows.
    init_bound = 1.0 / codebook_size
    cb = jax.random.uniform(k_cb, (codebook_size, feature_dim),
                            dtype=jnp.float32) * 2 * init_bound - init_bound
    cb = cb / jnp.maximum(jnp.linalg.norm(cb, axis=1, keepdims=True), 1e-12)

    x = jax.random.normal(k_x, (batch, feature_dim), dtype=jnp.float32)

    out = codebook_mapper_forward(x, cb, tau=tau)
    out = jax.block_until_ready(out)

    ref = _reference(x, cb, tau)
    assert out.shape == (batch, feature_dim)
    # bf16 MXU inputs with f32 accumulation: slightly looser tolerance than pure f32.
    assert jnp.allclose(out, ref, atol=5e-3, rtol=5e-3), "mismatch vs reference"

    print("KERNEL_OK")
</pallas_src>

<mosaic_0001>
module attributes {stable_mosaic.version = 11 : i64} {
  func.func @_codebook_mapper_kernel(%arg0: i32, %arg1: memref<16x128xf32, #tpu.memory_space<vmem>>, %arg2: memref<128x128xbf16, #tpu.memory_space<vmem>>, %arg3: memref<16x128xf32, #tpu.memory_space<vmem>>) attributes {dimension_semantics = [#tpu.dimension_semantics<parallel>], iteration_bounds = array<i64: 1>, scalar_prefetch = 0 : i64, scratch_operands = 0 : i64, tpu.core_type = #tpu.core_type<tc>, window_params = [{transform_indices = @transform_0, window_bounds = array<i64: 16, 128>}, {pipeline_mode = #tpu.pipeline_mode<synchronous>, transform_indices = @transform_1, window_bounds = array<i64: 128, 128>}, {transform_indices = @transform_2, window_bounds = array<i64: 16, 128>}]} {
    %c0 = arith.constant 0 : index
    %c0_0 = arith.constant 0 : index
    %0 = vector.load %arg1[%c0, %c0_0] : memref<16x128xf32, #tpu.memory_space<vmem>>, vector<16x128xf32>
    %c0_1 = arith.constant 0 : index
    %c0_2 = arith.constant 0 : index
    %1 = vector.load %arg2[%c0_1, %c0_2] : memref<128x128xbf16, #tpu.memory_space<vmem>>, vector<128x128xbf16>
    %2 = arith.mulf %0, %0 : vector<16x128xf32>
    %cst = arith.constant dense<0.000000e+00> : vector<16xf32>
    %3 = vector.multi_reduction <add>, %2, %cst [1] : vector<16x128xf32> to vector<16xf32>
    %4 = vector.shape_cast %3 : vector<16xf32> to vector<16x1xf32>
    %cst_3 = arith.constant 1.000000e-24 : f32
    %5 = vector.broadcast %cst_3 : f32 to vector<16x1xf32>
    %6 = arith.maximumf %4, %5 : vector<16x1xf32>
    %7 = math.rsqrt %6 : vector<16x1xf32>
    %cst_4 = arith.constant 14.2857141 : f32
    %8 = vector.broadcast %cst_4 : f32 to vector<16x1xf32>
    %9 = arith.mulf %7, %8 : vector<16x1xf32>
    %10 = arith.truncf %0 : vector<16x128xf32> to vector<16x128xbf16>
    %cst_5 = arith.constant dense<0.000000e+00> : vector<16x128xf32>
    %11 = tpu.matmul %10, %1, %cst_5 {dimension_numbers = #tpu.dot_dimension_numbers<[1], [1], [0], [0], [0, 0, 1, 0], [], []>} : vector<16x128xbf16>, vector<128x128xbf16>, vector<16x128xf32> -> vector<16x128xf32>
    %12 = vector.broadcast %9 : vector<16x1xf32> to vector<16x128xf32>
    %13 = arith.mulf %11, %12 : vector<16x128xf32>
    %14 = tpu.iota {dimensions = array<i32: 1>} : vector<16x128xi32>
    %c32_i32 = arith.constant 32 : i32
    %15 = vector.broadcast %c32_i32 : i32 to vector<16x128xi32>
    %16 = arith.cmpi slt, %14, %15 : vector<16x128xi32>
    %cst_6 = arith.constant -1.000000e+30 : f32
    %17 = vector.broadcast %cst_6 : f32 to vector<16x128xf32>
    %18 = arith.select %16, %13, %17 : vector<16x128xi1>, vector<16x128xf32>
    %cst_7 = arith.constant 14.2857141 : f32
    %19 = vector.broadcast %cst_7 : f32 to vector<16x128xf32>
    %20 = arith.subf %18, %19 : vector<16x128xf32>
    %21 = math.exp %20 : vector<16x128xf32>
    %cst_8 = arith.constant dense<0.000000e+00> : vector<16xf32>
    %22 = vector.multi_reduction <add>, %21, %cst_8 [1] : vector<16x128xf32> to vector<16xf32>
    %23 = vector.shape_cast %22 : vector<16xf32> to vector<16x1xf32>
    %24 = tpu.reciprocal %23 : vector<16x1xf32> -> vector<16x1xf32>
    %25 = vector.broadcast %24 : vector<16x1xf32> to vector<16x128xf32>
    %26 = arith.mulf %21, %25 : vector<16x128xf32>
    %27 = arith.truncf %26 : vector<16x128xf32> to vector<16x128xbf16>
    %cst_9 = arith.constant dense<0.000000e+00> : vector<16x128xf32>
    %28 = tpu.matmul %27, %1, %cst_9 {dimension_numbers = #tpu.dot_dimension_numbers<[1], [0], [0], [1], [0, 0, 1, 1], [], []>} : vector<16x128xbf16>, vector<128x128xbf16>, vector<16x128xf32> -> vector<16x128xf32>
    %c0_10 = arith.constant 0 : index
    %c0_11 = arith.constant 0 : index
    %29 = vector.load %arg3[%c0_10, %c0_11] : memref<16x128xf32, #tpu.memory_space<vmem>>, vector<16x128xf32>
    tpu.vector_store %arg3[%c0_10, %c0_11], %28 {strides = array<i32>} : memref<16x128xf32, #tpu.memory_space<vmem>>, vector<16x128xf32>,
    return
  }
  func.func @transform_0(%arg0: i32) -> (i32, i32) {
    %c0_i32 = arith.constant 0 : i32
    %c0_i32_0 = arith.constant 0 : i32
    return %arg0, %c0_i32 : i32, i32
  }
  func.func @transform_1(%arg0: i32) -> (i32, i32) {
    %c0_i32 = arith.constant 0 : i32
    %c0_i32_0 = arith.constant 0 : i32
    %c0_i32_1 = arith.constant 0 : i32
    return %c0_i32, %c0_i32_0 : i32, i32
  }
  func.func @transform_2(%arg0: i32) -> (i32, i32) {
    %c0_i32 = arith.constant 0 : i32
    %c0_i32_0 = arith.constant 0 : i32
    return %arg0, %c0_i32 : i32, i32
  }
}

module attributes {stable_mosaic.version = 11 : i64} {
  func.func @_codebook_mapper_kernel(%arg0: i32, %arg1: memref<16x128xf32, #tpu.memory_space<vmem>>, %arg2: memref<128x128xbf16, #tpu.memory_space<vmem>>, %arg3: memref<16x128xf32, #tpu.memory_space<vmem>>) attributes {dimension_semantics = [#tpu.dimension_semantics<parallel>], iteration_bounds = array<i64: 1>, scalar_prefetch = 0 : i64, scratch_operands = 0 : i64, tpu.core_type = #tpu.core_type<tc>, window_params = [{transform_indices = @transform_0, window_bounds = array<i64: 16, 128>}, {pipeline_mode = #tpu.pipeline_mode<synchronous>, transform_indices = @transform_1, window_bounds = array<i64: 128, 128>}, {transform_indices = @transform_2, window_bounds = array<i64: 16, 128>}]} {
    %c0 = arith.constant 0 : index
    %c0_0 = arith.constant 0 : index
    %0 = vector.load %arg1[%c0, %c0_0] : memref<16x128xf32, #tpu.memory_space<vmem>>, vector<16x128xf32>
    %c0_1 = arith.constant 0 : index
    %c0_2 = arith.constant 0 : index
    %1 = vector.load %arg2[%c0_1, %c0_2] : memref<128x128xbf16, #tpu.memory_space<vmem>>, vector<128x128xbf16>
    %2 = arith.mulf %0, %0 : vector<16x128xf32>
    %cst = arith.constant dense<0.000000e+00> : vector<16xf32>
    %3 = vector.multi_reduction <add>, %2, %cst [1] : vector<16x128xf32> to vector<16xf32>
    %4 = vector.shape_cast %3 : vector<16xf32> to vector<16x1xf32>
    %cst_3 = arith.constant 1.000000e-24 : f32
    %5 = vector.broadcast %cst_3 : f32 to vector<16x1xf32>
    %6 = arith.maximumf %4, %5 : vector<16x1xf32>
    %7 = math.rsqrt %6 : vector<16x1xf32>
    %cst_4 = arith.constant 14.2857141 : f32
    %8 = vector.broadcast %cst_4 : f32 to vector<16x1xf32>
    %9 = arith.mulf %7, %8 : vector<16x1xf32>
    %10 = arith.truncf %0 : vector<16x128xf32> to vector<16x128xbf16>
    %cst_5 = arith.constant dense<0.000000e+00> : vector<16x128xf32>
    %11 = tpu.matmul %10, %1, %cst_5 {dimension_numbers = #tpu.dot_dimension_numbers<[1], [1], [0], [0], [0, 0, 1, 0], [], []>} : vector<16x128xbf16>, vector<128x128xbf16>, vector<16x128xf32> -> vector<16x128xf32>
    %12 = vector.broadcast %9 : vector<16x1xf32> to vector<16x128xf32>
    %13 = arith.mulf %11, %12 : vector<16x128xf32>
    %14 = tpu.iota {dimensions = array<i32: 1>} : vector<16x128xi32>
    %c32_i32 = arith.constant 32 : i32
    %15 = vector.broadcast %c32_i32 : i32 to vector<16x128xi32>
    %16 = arith.cmpi slt, %14, %15 : vector<16x128xi32>
    %cst_6 = arith.constant -1.000000e+30 : f32
    %17 = vector.broadcast %cst_6 : f32 to vector<16x128xf32>
    %18 = arith.select %16, %13, %17 : vector<16x128xi1>, vector<16x128xf32>
    %cst_7 = arith.constant 14.2857141 : f32
    %19 = vector.broadcast %cst_7 : f32 to vector<16x128xf32>
    %20 = arith.subf %18, %19 : vector<16x128xf32>
    %21 = math.exp %20 : vector<16x128xf32>
    %cst_8 = arith.constant dense<0.000000e+00> : vector<16xf32>
    %22 = vector.multi_reduction <add>, %21, %cst_8 [1] : vector<16x128xf32> to vector<16xf32>
    %23 = vector.shape_cast %22 : vector<16xf32> to vector<16x1xf32>
    %24 = tpu.reciprocal %23 : vector<16x1xf32> -> vector<16x1xf32>
    %25 = vector.broadcast %24 : vector<16x1xf32> to vector<16x128xf32>
    %26 = arith.mulf %21, %25 : vector<16x128xf32>
    %27 = arith.truncf %26 : vector<16x128xf32> to vector<16x128xbf16>
    %cst_9 = arith.constant dense<0.000000e+00> : vector<16x128xf32>
    %28 = tpu.matmul %27, %1, %cst_9 {dimension_numbers = #tpu.dot_dimension_numbers<[1], [0], [0], [1], [0, 0, 1, 1], [], []>} : vector<16x128xbf16>, vector<128x128xbf16>, vector<16x128xf32> -> vector<16x128xf32>
    %c0_10 = arith.constant 0 : index
    %c0_11 = arith.constant 0 : index
    %29 = vector.load %arg3[%c0_10, %c0_11] : memref<16x128xf32, #tpu.memory_space<vmem>>, vector<16x128xf32>
    tpu.vector_store %arg3[%c0_10, %c0_11], %28 {strides = array<i32>} : memref<16x128xf32, #tpu.memory_space<vmem>>, vector<16x128xf32>,
    return
  }
  func.func @transform_0(%arg0: i32) -> (i32, i32) {
    %c0_i32 = arith.constant 0 : i32
    %c0_i32_0 = arith.constant 0 : i32
    return %arg0, %c0_i32 : i32, i32
  }
  func.func @transform_1(%arg0: i32) -> (i32, i32) {
    %c0_i32 = arith.constant 0 : i32
    %c0_i32_0 = arith.constant 0 : i32
    %c0_i32_1 = arith.constant 0 : i32
    return %c0_i32, %c0_i32_0 : i32, i32
  }
  func.func @transform_2(%arg0: i32) -> (i32, i32) {
    %c0_i32 = arith.constant 0 : i32
    %c0_i32_0 = arith.constant 0 : i32
    return %arg0, %c0_i32 : i32, i32
  }
}

</mosaic_0001>

<llo_original>
// kernel: tpu_custom_call.1
$region0: #{tpu_custom_call.1}
  #allocation0 [shape = 'u32[]', space=smem, size = 0x4, offset = 0x4, fixed_abs, tag = 'smem constant byte address 0x4 - core index']
  #allocation1 [shape = 'u32[72,128]{1,0:T(1,128)}', space=vmem, size = 0x9000, scoped, tag = 'internal scratch']
  %s0 = inlined_call_operand.hbm [shape: f32[16,128], index: 0, kind: input, shape index: {}]
  %s1 = inlined_call_operand.hbm [shape: bf16[128,128], index: 1, kind: input, shape index: {}]
  %s2 = inlined_call_operand.hbm [shape: f32[16,128], index: 2, kind: output, shape index: {}]
  %s3 = sld [smem:[#allocation0]]
  $region26: #{tpu_custom_call.1} parent=0
    _
  %s5 = ssub.s32 1, %s3
  %s6 = scalar_select 0, %s5, %s3
  $region1: #{tpu_custom_call.1} parent=0
    #allocation2 [shape = 'u8[8192]{0}', space=vmem, size = 0x2000, scoped, tag = 'input window, operand 0, single buffered']
    #allocation3 [shape = 's32[1]{0}', space=sflag, size = 0x4, scoped, tag = 'scoped memory for tpu_custom_call.1']
    #allocation4 [shape = 's32[1]{0}', space=sflag, size = 0x4, scoped, tag = 'scoped memory for tpu_custom_call.1']
    #allocation5 [shape = 'u8[32768]{0}', space=vmem, size = 0x8000, scoped, tag = 'input window, operand 1, single buffered']
    #allocation6 [shape = 's32[1]{0}', space=sflag, size = 0x4, scoped, tag = 'scoped memory for tpu_custom_call.1']
    #allocation7 [shape = 'u8[8192]{0}', space=vmem, size = 0x2000, scoped, tag = 'output window, operand 0, single buffered']
    %7 = vsyncpa [#allocation3], 0
    %8 = vsyncpa [#allocation6], 0
    %9 = vsyncpa [#allocation4], 0
    // Predicated region
    $region2: #{tpu_custom_call.1} parent=1 // pred_check
      _
    $region3: #{tpu_custom_call.1} parent=1 // pred_check_branch
      %11 = sbr.rel (0) target = $region5
    $region4: #{tpu_custom_call.1} parent=1 // pred_region
      %13 = vsyncadd [#allocation3], 0
      %s14 = sshll.u32 %s0, 4
      %s15 = int_to_ptr.hbm [resolvable:$true] %s14
      %s16 = sshll.u32 [#allocation2], 4
      %s17 = int_to_ptr.vmem [resolvable:$true] %s16
      %22 = dma.hbm_to_vmem [thread:$0]  %s15, 256, %s17, [#allocation3], 128, 128, 8
    $region5: #{tpu_custom_call.1} parent=1 // pred_fallthru
      _
    // Predicated region
    $region6: #{tpu_custom_call.1} parent=1 // pred_check
      _
    $region7: #{tpu_custom_call.1} parent=1 // pred_check_branch
      %24 = sbr.rel (0) target = $region9
    $region8: #{tpu_custom_call.1} parent=1 // pred_region
      %26 = vsyncadd [#allocation6], 0
      %s27 = sshll.u32 %s1, 4
      %s28 = int_to_ptr.hbm [resolvable:$true] %s27
      %s29 = sshll.u32 [#allocation5], 4
      %s30 = int_to_ptr.vmem [resolvable:$true] %s29
      %35 = dma.hbm_to_vmem [thread:$0]  %s28, 1024, %s30, [#allocation6], 64, 64, 4
    $region9: #{tpu_custom_call.1} parent=1 // pred_fallthru
      _
    // Predicated region
    $region10: #{tpu_custom_call.1} parent=1 // pred_check
      _
    $region11: #{tpu_custom_call.1} parent=1 // pred_check_branch
      %37 = sbr.rel (0) target = $region13
    $region12: #{tpu_custom_call.1} parent=1 // pred_region
      %39 = dma.done [#allocation3], 256
    $region13: #{tpu_custom_call.1} parent=1 // pred_fallthru
      _
    // Predicated region
    $region14: #{tpu_custom_call.1} parent=1 // pred_check
      _
    $region15: #{tpu_custom_call.1} parent=1 // pred_check_branch
      %41 = sbr.rel (0) target = $region17
    $region16: #{tpu_custom_call.1} parent=1 // pred_region
      %43 = dma.done [#allocation6], 1024
    $region17: #{tpu_custom_call.1} parent=1 // pred_fallthru
      _
    %v44 = vld [vmem:[#allocation2] sm:$0xff]
    %v45 = vld [vmem:[#allocation2 + $0x8] sm:$0xff]
    %v46 = vld [vmem:[#allocation5] sm:$0xf]
    %v47 = vld [vmem:[#allocation5 + $0x4] sm:$0xf]
    %v48 = vld [vmem:[#allocation5 + $0x8] sm:$0xf]
    %v49 = vld [vmem:[#allocation5 + $0xc] sm:$0xf]
    %v50 = vld [vmem:[#allocation5 + $0x10] sm:$0xf]
    %v51 = vld [vmem:[#allocation5 + $0x14] sm:$0xf]
    %v52 = vld [vmem:[#allocation5 + $0x18] sm:$0xf]
    %v53 = vld [vmem:[#allocation5 + $0x1c] sm:$0xf]
    %v54 = vld [vmem:[#allocation5 + $0x20] sm:$0xf]
    %v55 = vld [vmem:[#allocation5 + $0x24] sm:$0xf]
    %v56 = vld [vmem:[#allocation5 + $0x28] sm:$0xf]
    %v57 = vld [vmem:[#allocation5 + $0x2c] sm:$0xf]
    %v58 = vld [vmem:[#allocation5 + $0x30] sm:$0xf]
    %v59 = vld [vmem:[#allocation5 + $0x34] sm:$0xf]
    %v60 = vld [vmem:[#allocation5 + $0x38] sm:$0xf]
    %v61 = vld [vmem:[#allocation5 + $0x3c] sm:$0xf]
    %v62 = vmul.f32 %v44, %v44
    %v63 = vmul.f32 %v45, %v45
    %64 = vadd.xlane.f32.xlu0 %v62
    %v65 = vpop.xlane.xlu0 %64
    %66 = vadd.xlane.f32.xlu0 %v63
    %v67 = vpop.xlane.xlu0 %66
    %v68 = vmax.f32 %v65, 1e-24
    %v69 = vmax.f32 %v67, 1e-24
    %v70 = vrsqrt.pop %v68
    %v71 = vmul.f32 %v70, %v68
    %v72 = vmul.f32 %v71, %v70
    %v73 = vmul.f32 0.5, %v72
    %v74 = vsub.f32 1.5, %v73
    %v75 = vmul.f32 %v70, %v74
    %vm76 = vweird.f32 %v68
    %vm77 = vweird.f32 %v70
    %vm78 = vmor %vm76, %vm77
    %v79 = vsel %vm78, %v70, %v75
    %v80 = vrsqrt.pop %v69
    %v81 = vmul.f32 %v80, %v69
    %v82 = vmul.f32 %v81, %v80
    %v83 = vmul.f32 0.5, %v82
    %v84 = vsub.f32 1.5, %v83
    %v85 = vmul.f32 %v80, %v84
    %vm86 = vweird.f32 %v69
    %vm87 = vweird.f32 %v80
    %vm88 = vmor %vm86, %vm87
    %v89 = vsel %vm88, %v80, %v85
    %v90 = vmul.f32 %v79, 14.285714
    %v91 = vmul.f32 %v89, 14.285714
    %v92 = vpack.c.bf16 %v45, %v44
    %v109 = vunpack.c.l.b16 %v46
    %v110 = vunpack.c.l.b16 %v47
    %v111 = vunpack.c.l.b16 %v48
    %v112 = vunpack.c.l.b16 %v49
    %v113 = vunpack.c.l.b16 %v50
    %v114 = vunpack.c.l.b16 %v51
    %v115 = vunpack.c.l.b16 %v52
    %v116 = vunpack.c.l.b16 %v53
    %v117 = vunpack.c.l.b16 %v54
    %v118 = vunpack.c.l.b16 %v55
    %v119 = vunpack.c.l.b16 %v56
    %v120 = vunpack.c.l.b16 %v57
    %v121 = vunpack.c.l.b16 %v58
    %v122 = vunpack.c.l.b16 %v59
    %v123 = vunpack.c.l.b16 %v60
    %v124 = vunpack.c.l.b16 %v61
    %v125 = vpack.c.b16 %v110, %v109
    %v126 = vpack.c.b16 %v112, %v111
    %v127 = vpack.c.b16 %v114, %v113
    %v128 = vpack.c.b16 %v116, %v115
    %v129 = vpack.c.b16 %v118, %v117
    %v130 = vpack.c.b16 %v120, %v119
    %v131 = vpack.c.b16 %v122, %v121
    %v132 = vpack.c.b16 %v124, %v123
    %141 = vmatpush.bf16.xpose.msra.mxu0 %v132
    %142 = vmatpush.bf16.xpose.msra.mxu0 %v131
    %143 = vmatpush.bf16.xpose.msra.mxu0 %v130
    %144 = vmatpush.bf16.xpose.msra.mxu0 %v129
    %145 = vmatpush.bf16.xpose.msra.mxu0 %v128
    %146 = vmatpush.bf16.xpose.msra.mxu0 %v127
    %147 = vmatpush.bf16.xpose.msra.mxu0 %v126
    %148 = vmatpush.bf16.xpose.msra.mxu0 %v125
    %149 = vmatmul.bf16.gmra.mxu0 %v92
    %v150 = vpop.f32.mrf.mxu0
    %v151 = vadd.f32 0.0, %v150
    %v152 = vpop.f32.mrf.mxu0
    %v153 = vadd.f32 0.0, %v152
    %154 = vdwg.mxu0
    %v155 = vmul.f32 %v151, %v90
    %v156 = vmul.f32 %v153, %v91
    %v157 = vlaneseq
    %v158 = vand.u32 %v157, 127
    %vm159 = vcmp.lt.s32.totalorder %v158, 32
    %v160 = vsel %vm159, %v155, -1e+30
    %v161 = vsel %vm159, %v156, -1e+30
    %v162 = vsub.f32 %v160, 14.285714
    %v163 = vsub.f32 %v161, 14.285714
    %v164 = vmul.f32 %v162, 1.442695
    %v165 = vpow.pop %v164
    %v166 = vmul.f32 %v163, 1.442695
    %v167 = vpow.pop %v166
    %168 = vadd.xlane.f32.xlu0 %v165
    %v169 = vpop.xlane.xlu0 %168
    %170 = vadd.xlane.f32.xlu0 %v167
    %v171 = vpop.xlane.xlu0 %170
    %v172 = vrcp.pop %v169
    %v173 = vmul.f32 %v169, %v172
    %v174 = vsub.f32 1.0, %v173
    %v175 = vmul.f32 %v172, %v174
    %v176 = vadd.f32 %v172, %v175
    %vm177 = vweird.f32 %v169
    %vm178 = vweird.f32 %v172
    %vm179 = vmor %vm177, %vm178
    %v180 = vsel %vm179, %v172, %v176
    %v181 = vand.u32 2147483647, %v169
    %vm182 = vcmp.eq.f32.partialorder %v181, 8.507059e+37
    %v183 = vand.u32 %v169, 2147483648
    %v184 = vor.u32 1.1754944e-38, %v183
    %v185 = vsel %vm182, %v184, %v180
    %v186 = vrcp.pop %v171
    %v187 = vmul.f32 %v171, %v186
    %v188 = vsub.f32 1.0, %v187
    %v189 = vmul.f32 %v186, %v188
    %v190 = vadd.f32 %v186, %v189
    %vm191 = vweird.f32 %v171
    %vm192 = vweird.f32 %v186
    %vm193 = vmor %vm191, %vm192
    %v194 = vsel %vm193, %v186, %v190
    %v195 = vand.u32 2147483647, %v171
    %vm196 = vcmp.eq.f32.partialorder %v195, 8.507059e+37
    %v197 = vand.u32 %v171, 2147483648
    %v198 = vor.u32 1.1754944e-38, %v197
    %v199 = vsel %vm196, %v198, %v194
    %v200 = vmul.f32 %v165, %v185
    %v201 = vmul.f32 %v167, %v199
    %v202 = vpack.c.bf16 %v201, %v200
    %203 = vmatpush.bf16.msra.mxu0 %v132
    %204 = vmatpush.bf16.msra.mxu0 %v131
    %205 = vmatpush.bf16.msra.mxu0 %v130
    %206 = vmatpush.bf16.msra.mxu0 %v129
    %207 = vmatpush.bf16.msra.mxu0 %v128
    %208 = vmatpush.bf16.msra.mxu0 %v127
    %209 = vmatpush.bf16.msra.mxu0 %v126
    %210 = vmatpush.bf16.msra.mxu0 %v125
    %211 = vmatmul.bf16.gmra.mxu0 %v202
    %v212 = vpop.f32.mrf.mxu0
    %v213 = vadd.f32 0.0, %v212
    %v214 = vpop.f32.mrf.mxu0
    %v215 = vadd.f32 0.0, %v214
    %216 = vdwg.mxu0
    %217 = vst [vmem:[#allocation7] sm:$0xff] %v213
    %218 = vst [vmem:[#allocation7 + $0x8] sm:$0xff] %v215
    // Predicated region
    $region18: #{tpu_custom_call.1} parent=1 // pred_check
      _
    $region19: #{tpu_custom_call.1} parent=1 // pred_check_branch
      %220 = sbr.rel (0) target = $region21
    $region20: #{tpu_custom_call.1} parent=1 // pred_region
      %222 = vsyncadd [#allocation4], 0
      %s223 = sshll.u32 [#allocation7], 4
      %s224 = int_to_ptr.vmem [resolvable:$true] %s223
      %s225 = sshll.u32 %s2, 4
      %s226 = int_to_ptr.hbm [resolvable:$true] %s225
      %231 = dma.vmem_to_hbm [thread:$0]  %s224, 256, %s226, [#allocation4], 128, 128, 8
    $region21: #{tpu_custom_call.1} parent=1 // pred_fallthru
      _
    // Predicated region
    $region22: #{tpu_custom_call.1} parent=1 // pred_check
      _
    $region23: #{tpu_custom_call.1} parent=1 // pred_check_branch
      %233 = sbr.rel (0) target = $region25
    $region24: #{tpu_custom_call.1} parent=1 // pred_region
      %235 = dma.done [#allocation4], 256
    $region25: #{tpu_custom_call.1} parent=1 // pred_fallthru
      _
    %236 = vsyncpa [#allocation3], 1
    %237 = vsyncpa [#allocation6], 1
    %238 = vsyncpa [#allocation4], 1

// kernel: tpu_custom_call.1
$region0: #{tpu_custom_call.1}
  #allocation0 [shape = 'u32[]', space=smem, size = 0x4, offset = 0x4, fixed_abs, tag = 'smem constant byte address 0x4 - core index']
  #allocation1 [shape = 'u32[72,128]{1,0:T(1,128)}', space=vmem, size = 0x9000, scoped, tag = 'internal scratch']
  %s0 = inlined_call_operand.hbm [shape: f32[16,128], index: 0, kind: input, shape index: {}]
  %s1 = inlined_call_operand.hbm [shape: bf16[128,128], index: 1, kind: input, shape index: {}]
  %s2 = inlined_call_operand.hbm [shape: f32[16,128], index: 2, kind: output, shape index: {}]
  %s3 = sld [smem:[#allocation0]]
  $region26: #{tpu_custom_call.1} parent=0
    _
  %s5 = ssub.s32 1, %s3
  %s6 = scalar_select 0, %s5, %s3
  $region1: #{tpu_custom_call.1} parent=0
    #allocation2 [shape = 'u8[8192]{0}', space=vmem, size = 0x2000, scoped, tag = 'input window, operand 0, single buffered']
    #allocation3 [shape = 's32[1]{0}', space=sflag, size = 0x4, scoped, tag = 'scoped memory for tpu_custom_call.1']
    #allocation4 [shape = 's32[1]{0}', space=sflag, size = 0x4, scoped, tag = 'scoped memory for tpu_custom_call.1']
    #allocation5 [shape = 'u8[32768]{0}', space=vmem, size = 0x8000, scoped, tag = 'input window, operand 1, single buffered']
    #allocation6 [shape = 's32[1]{0}', space=sflag, size = 0x4, scoped, tag = 'scoped memory for tpu_custom_call.1']
    #allocation7 [shape = 'u8[8192]{0}', space=vmem, size = 0x2000, scoped, tag = 'output window, operand 0, single buffered']
    %7 = vsyncpa [#allocation3], 0
    %8 = vsyncpa [#allocation6], 0
    %9 = vsyncpa [#allocation4], 0
    // Predicated region
    $region2: #{tpu_custom_call.1} parent=1 // pred_check
      _
    $region3: #{tpu_custom_call.1} parent=1 // pred_check_branch
      %11 = sbr.rel (0) target = $region5
    $region4: #{tpu_custom_call.1} parent=1 // pred_region
      %13 = vsyncadd [#allocation3], 0
      %s14 = sshll.u32 %s0, 4
      %s15 = int_to_ptr.hbm [resolvable:$true] %s14
      %s16 = sshll.u32 [#allocation2], 4
      %s17 = int_to_ptr.vmem [resolvable:$true] %s16
      %22 = dma.hbm_to_vmem [thread:$0]  %s15, 256, %s17, [#allocation3], 128, 128, 8
    $region5: #{tpu_custom_call.1} parent=1 // pred_fallthru
      _
    // Predicated region
    $region6: #{tpu_custom_call.1} parent=1 // pred_check
      _
    $region7: #{tpu_custom_call.1} parent=1 // pred_check_branch
      %24 = sbr.rel (0) target = $region9
    $region8: #{tpu_custom_call.1} parent=1 // pred_region
      %26 = vsyncadd [#allocation6], 0
      %s27 = sshll.u32 %s1, 4
      %s28 = int_to_ptr.hbm [resolvable:$true] %s27
      %s29 = sshll.u32 [#allocation5], 4
      %s30 = int_to_ptr.vmem [resolvable:$true] %s29
      %35 = dma.hbm_to_vmem [thread:$0]  %s28, 1024, %s30, [#allocation6], 64, 64, 4
    $region9: #{tpu_custom_call.1} parent=1 // pred_fallthru
      _
    // Predicated region
    $region10: #{tpu_custom_call.1} parent=1 // pred_check
      _
    $region11: #{tpu_custom_call.1} parent=1 // pred_check_branch
      %37 = sbr.rel (0) target = $region13
    $region12: #{tpu_custom_call.1} parent=1 // pred_region
      %39 = dma.done [#allocation3], 256
    $region13: #{tpu_custom_call.1} parent=1 // pred_fallthru
      _
    // Predicated region
    $region14: #{tpu_custom_call.1} parent=1 // pred_check
      _
    $region15: #{tpu_custom_call.1} parent=1 // pred_check_branch
      %41 = sbr.rel (0) target = $region17
    $region16: #{tpu_custom_call.1} parent=1 // pred_region
      %43 = dma.done [#allocation6], 1024
    $region17: #{tpu_custom_call.1} parent=1 // pred_fallthru
      _
    %v44 = vld [vmem:[#allocation2] sm:$0xff]
    %v45 = vld [vmem:[#allocation2 + $0x8] sm:$0xff]
    %v46 = vld [vmem:[#allocation5] sm:$0xf]
    %v47 = vld [vmem:[#allocation5 + $0x4] sm:$0xf]
    %v48 = vld [vmem:[#allocation5 + $0x8] sm:$0xf]
    %v49 = vld [vmem:[#allocation5 + $0xc] sm:$0xf]
    %v50 = vld [vmem:[#allocation5 + $0x10] sm:$0xf]
    %v51 = vld [vmem:[#allocation5 + $0x14] sm:$0xf]
    %v52 = vld [vmem:[#allocation5 + $0x18] sm:$0xf]
    %v53 = vld [vmem:[#allocation5 + $0x1c] sm:$0xf]
    %v54 = vld [vmem:[#allocation5 + $0x20] sm:$0xf]
    %v55 = vld [vmem:[#allocation5 + $0x24] sm:$0xf]
    %v56 = vld [vmem:[#allocation5 + $0x28] sm:$0xf]
    %v57 = vld [vmem:[#allocation5 + $0x2c] sm:$0xf]
    %v58 = vld [vmem:[#allocation5 + $0x30] sm:$0xf]
    %v59 = vld [vmem:[#allocation5 + $0x34] sm:$0xf]
    %v60 = vld [vmem:[#allocation5 + $0x38] sm:$0xf]
    %v61 = vld [vmem:[#allocation5 + $0x3c] sm:$0xf]
    %v62 = vmul.f32 %v44, %v44
    %v63 = vmul.f32 %v45, %v45
    %64 = vadd.xlane.f32.xlu0 %v62
    %v65 = vpop.xlane.xlu0 %64
    %66 = vadd.xlane.f32.xlu0 %v63
    %v67 = vpop.xlane.xlu0 %66
    %v68 = vmax.f32 %v65, 1e-24
    %v69 = vmax.f32 %v67, 1e-24
    %v70 = vrsqrt.pop %v68
    %v71 = vmul.f32 %v70, %v68
    %v72 = vmul.f32 %v71, %v70
    %v73 = vmul.f32 0.5, %v72
    %v74 = vsub.f32 1.5, %v73
    %v75 = vmul.f32 %v70, %v74
    %vm76 = vweird.f32 %v68
    %vm77 = vweird.f32 %v70
    %vm78 = vmor %vm76, %vm77
    %v79 = vsel %vm78, %v70, %v75
    %v80 = vrsqrt.pop %v69
    %v81 = vmul.f32 %v80, %v69
    %v82 = vmul.f32 %v81, %v80
    %v83 = vmul.f32 0.5, %v82
    %v84 = vsub.f32 1.5, %v83
    %v85 = vmul.f32 %v80, %v84
    %vm86 = vweird.f32 %v69
    %vm87 = vweird.f32 %v80
    %vm88 = vmor %vm86, %vm87
    %v89 = vsel %vm88, %v80, %v85
    %v90 = vmul.f32 %v79, 14.285714
    %v91 = vmul.f32 %v89, 14.285714
    %v92 = vpack.c.bf16 %v45, %v44
    %v109 = vunpack.c.l.b16 %v46
    %v110 = vunpack.c.l.b16 %v47
    %v111 = vunpack.c.l.b16 %v48
    %v112 = vunpack.c.l.b16 %v49
    %v113 = vunpack.c.l.b16 %v50
    %v114 = vunpack.c.l.b16 %v51
    %v115 = vunpack.c.l.b16 %v52
    %v116 = vunpack.c.l.b16 %v53
    %v117 = vunpack.c.l.b16 %v54
    %v118 = vunpack.c.l.b16 %v55
    %v119 = vunpack.c.l.b16 %v56
    %v120 = vunpack.c.l.b16 %v57
    %v121 = vunpack.c.l.b16 %v58
    %v122 = vunpack.c.l.b16 %v59
    %v123 = vunpack.c.l.b16 %v60
    %v124 = vunpack.c.l.b16 %v61
    %v125 = vpack.c.b16 %v110, %v109
    %v126 = vpack.c.b16 %v112, %v111
    %v127 = vpack.c.b16 %v114, %v113
    %v128 = vpack.c.b16 %v116, %v115
    %v129 = vpack.c.b16 %v118, %v117
    %v130 = vpack.c.b16 %v120, %v119
    %v131 = vpack.c.b16 %v122, %v121
    %v132 = vpack.c.b16 %v124, %v123
    %141 = vmatpush.bf16.xpose.msra.mxu0 %v132
    %142 = vmatpush.bf16.xpose.msra.mxu0 %v131
    %143 = vmatpush.bf16.xpose.msra.mxu0 %v130
    %144 = vmatpush.bf16.xpose.msra.mxu0 %v129
    %145 = vmatpush.bf16.xpose.msra.mxu0 %v128
    %146 = vmatpush.bf16.xpose.msra.mxu0 %v127
    %147 = vmatpush.bf16.xpose.msra.mxu0 %v126
    %148 = vmatpush.bf16.xpose.msra.mxu0 %v125
    %149 = vmatmul.bf16.gmra.mxu0 %v92
    %v150 = vpop.f32.mrf.mxu0
    %v151 = vadd.f32 0.0, %v150
    %v152 = vpop.f32.mrf.mxu0
    %v153 = vadd.f32 0.0, %v152
    %154 = vdwg.mxu0
    %v155 = vmul.f32 %v151, %v90
    %v156 = vmul.f32 %v153, %v91
    %v157 = vlaneseq
    %v158 = vand.u32 %v157, 127
    %vm159 = vcmp.lt.s32.totalorder %v158, 32
    %v160 = vsel %vm159, %v155, -1e+30
    %v161 = vsel %vm159, %v156, -1e+30
    %v162 = vsub.f32 %v160, 14.285714
    %v163 = vsub.f32 %v161, 14.285714
    %v164 = vmul.f32 %v162, 1.442695
    %v165 = vpow.pop %v164
    %v166 = vmul.f32 %v163, 1.442695
    %v167 = vpow.pop %v166
    %168 = vadd.xlane.f32.xlu0 %v165
    %v169 = vpop.xlane.xlu0 %168
    %170 = vadd.xlane.f32.xlu0 %v167
    %v171 = vpop.xlane.xlu0 %170
    %v172 = vrcp.pop %v169
    %v173 = vmul.f32 %v169, %v172
    %v174 = vsub.f32 1.0, %v173
    %v175 = vmul.f32 %v172, %v174
    %v176 = vadd.f32 %v172, %v175
    %vm177 = vweird.f32 %v169
    %vm178 = vweird.f32 %v172
    %vm179 = vmor %vm177, %vm178
    %v180 = vsel %vm179, %v172, %v176
    %v181 = vand.u32 2147483647, %v169
    %vm182 = vcmp.eq.f32.partialorder %v181, 8.507059e+37
    %v183 = vand.u32 %v169, 2147483648
    %v184 = vor.u32 1.1754944e-38, %v183
    %v185 = vsel %vm182, %v184, %v180
    %v186 = vrcp.pop %v171
    %v187 = vmul.f32 %v171, %v186
    %v188 = vsub.f32 1.0, %v187
    %v189 = vmul.f32 %v186, %v188
    %v190 = vadd.f32 %v186, %v189
    %vm191 = vweird.f32 %v171
    %vm192 = vweird.f32 %v186
    %vm193 = vmor %vm191, %vm192
    %v194 = vsel %vm193, %v186, %v190
    %v195 = vand.u32 2147483647, %v171
    %vm196 = vcmp.eq.f32.partialorder %v195, 8.507059e+37
    %v197 = vand.u32 %v171, 2147483648
    %v198 = vor.u32 1.1754944e-38, %v197
    %v199 = vsel %vm196, %v198, %v194
    %v200 = vmul.f32 %v165, %v185
    %v201 = vmul.f32 %v167, %v199
    %v202 = vpack.c.bf16 %v201, %v200
    %203 = vmatpush.bf16.msra.mxu0 %v132
    %204 = vmatpush.bf16.msra.mxu0 %v131
    %205 = vmatpush.bf16.msra.mxu0 %v130
    %206 = vmatpush.bf16.msra.mxu0 %v129
    %207 = vmatpush.bf16.msra.mxu0 %v128
    %208 = vmatpush.bf16.msra.mxu0 %v127
    %209 = vmatpush.bf16.msra.mxu0 %v126
    %210 = vmatpush.bf16.msra.mxu0 %v125
    %211 = vmatmul.bf16.gmra.mxu0 %v202
    %v212 = vpop.f32.mrf.mxu0
    %v213 = vadd.f32 0.0, %v212
    %v214 = vpop.f32.mrf.mxu0
    %v215 = vadd.f32 0.0, %v214
    %216 = vdwg.mxu0
    %217 = vst [vmem:[#allocation7] sm:$0xff] %v213
    %218 = vst [vmem:[#allocation7 + $0x8] sm:$0xff] %v215
    // Predicated region
    $region18: #{tpu_custom_call.1} parent=1 // pred_check
      _
    $region19: #{tpu_custom_call.1} parent=1 // pred_check_branch
      %220 = sbr.rel (0) target = $region21
    $region20: #{tpu_custom_call.1} parent=1 // pred_region
      %222 = vsyncadd [#allocation4], 0
      %s223 = sshll.u32 [#allocation7], 4
      %s224 = int_to_ptr.vmem [resolvable:$true] %s223
      %s225 = sshll.u32 %s2, 4
      %s226 = int_to_ptr.hbm [resolvable:$true] %s225
      %231 = dma.vmem_to_hbm [thread:$0]  %s224, 256, %s226, [#allocation4], 128, 128, 8
    $region21: #{tpu_custom_call.1} parent=1 // pred_fallthru
      _
    // Predicated region
    $region22: #{tpu_custom_call.1} parent=1 // pred_check
      _
    $region23: #{tpu_custom_call.1} parent=1 // pred_check_branch
      %233 = sbr.rel (0) target = $region25
    $region24: #{tpu_custom_call.1} parent=1 // pred_region
      %235 = dma.done [#allocation4], 256
    $region25: #{tpu_custom_call.1} parent=1 // pred_fallthru
      _
    %236 = vsyncpa [#allocation3], 1
    %237 = vsyncpa [#allocation6], 1
    %238 = vsyncpa [#allocation4], 1

</llo_original>
